<compile_context>
chip_gen: v7x
topology: tpu7x:2x2x1
jax: 0.10.0
libtpu: 0.0.40
codegen_flags: <defaults>
</compile_context>

<pallas_src>
import functools

import jax
import jax.numpy as jnp
from jax import lax
from jax.experimental import pallas as pl
from jax.experimental.pallas import tpu as pltpu

_VMEM_BUDGET = 40 * 1024 * 1024  # double-buffered working-set target (v7x-safe)


def _round_up(a, b):
    return ((a + b - 1) // b) * b


def patch_embed_kernel(x_ref, w_ref, b_ref, o_ref, *, e_out):
    # x_ref: (tm, Kp) bf16 patch rows
    # w_ref: (Kp, Ep) bf16 projection matrix (conv weight reshaped+transposed, lane-padded)
    # b_ref: (1, Ep)  f32 bias (lane-padded)
    # o_ref: (tm, E)  out_dtype (unpadded embed dim)
    acc = jnp.dot(x_ref[...], w_ref[...], preferred_element_type=jnp.float32)
    acc = acc + b_ref[...]
    o_ref[...] = acc[:, :e_out].astype(o_ref.dtype)


def patch_embed(x, weight, bias, patch_size, *, out_dtype=jnp.bfloat16, max_tm=2048):
    """x: (B, C, H, W); weight: (E, C, p, p); bias: (E,).
    Returns (B, (H//p)*(W//p), E) -- same as PatchEmbed.forward (norm_layer=None).
    Output dtype defaults to bf16 (f32 accumulation + f32 bias add inside)."""
    B, C, H, W = x.shape
    p = patch_size
    assert H % p == 0 and W % p == 0
    Hp, Wp = H // p, W // p
    E = weight.shape[0]
    K = C * p * p
    M = B * Hp * Wp

    # Patchify producer: single XLA pass (f32 read -> bf16 write).  See TODO above.
    xb = x.astype(jnp.bfloat16)
    patches = (
        xb.reshape(B, C, Hp, p, Wp, p)
        .transpose(0, 2, 4, 1, 3, 5)
        .reshape(M, K)
    )

    # K lane-padding only when cheap (<= 12.5% extra bytes on the (M, K) stream);
    # the pad fuses into the patchify producer, no extra HBM pass.
    Kp = _round_up(K, 128)
    if Kp != K and (Kp - K) * 8 > K:
        Kp = K
    if Kp != K:
        patches = jnp.pad(patches, ((0, 0), (0, Kp - K)))

    # Weight / bias, lane-padded to Ep (multiple of 128) for dense MXU feeding.
    Ep = _round_up(E, 128)
    w_mat = jnp.zeros((Kp, Ep), jnp.bfloat16).at[:K, :E].set(
        weight.reshape(E, K).T.astype(jnp.bfloat16)
    )
    b_mat = jnp.zeros((1, Ep), jnp.float32).at[:, :E].set(
        bias.astype(jnp.float32)[None, :]
    )

    out_itemsize = jnp.dtype(out_dtype).itemsize

    # ---- tile size: >= 2 grid steps for v7x megacore, then VMEM-budgeted. ----
    if M <= 2 * max_tm:
        tm = max(8, _round_up(pl.cdiv(M, 2), 8))
    else:
        tm = max_tm

    def _vmem_need(t):
        return (
            2 * t * Kp * 2            # LHS tiles, double-buffered bf16
            + 2 * Kp * Ep * 2         # weight (grid-invariant, assume 2 buffers)
            + 2 * 8 * Ep * 4          # bias (sublane-padded)
            + 2 * t * E * out_itemsize  # output tiles
            + t * Ep * 4              # f32 accumulator headroom
        )

    while tm > 8 and _vmem_need(tm) > _VMEM_BUDGET:
        tm = max(8, _round_up(tm // 2, 8))

    grid = (pl.cdiv(M, tm),)  # ragged last M tile: reads padded, write-back clipped
    vmem_limit = int(min(max(_vmem_need(tm) + (8 << 20), 32 << 20), 48 << 20))

    # Advisory only: covers the pallas_call itself (the patchify producer is a
    # separate XLA pass not counted here).
    cost = pl.CostEstimate(
        flops=2 * M * Kp * Ep,
        transcendentals=0,
        bytes_accessed=M * Kp * 2 + Kp * Ep * 2 + Ep * 4 + M * E * out_itemsize,
    )

    kernel = functools.partial(patch_embed_kernel, e_out=E)

    out = pl.pallas_call(
        kernel,
        out_shape=jax.ShapeDtypeStruct((M, E), out_dtype),
        grid_spec=pltpu.PrefetchScalarGridSpec(
            num_scalar_prefetch=0,
            grid=grid,
            in_specs=[
                pl.BlockSpec((tm, Kp), lambda i: (i, 0)),
                pl.BlockSpec((Kp, Ep), lambda i: (0, 0)),
                pl.BlockSpec((1, Ep), lambda i: (0, 0)),
            ],
            out_specs=pl.BlockSpec((tm, E), lambda i: (i, 0)),
        ),
        compiler_params=pltpu.CompilerParams(
            dimension_semantics=("parallel",),
            vmem_limit_bytes=vmem_limit,
        ),
        cost_estimate=cost,
    )(patches, w_mat, b_mat)

    return out.reshape(B, Hp * Wp, E)


if __name__ == "__main__":
    # Small, PatchEmbed-consistent shapes: B=2, in_chans=3, img 16x16, patch=2, embed_dim=32.
    B, C, H, W = 2, 3, 16, 16
    patch_size = 2
    embed_dim = 32

    key = jax.random.PRNGKey(0)
    kx, kw, kb = jax.random.split(key, 3)
    x = jax.random.normal(kx, (B, C, H, W), dtype=jnp.float32)
    # Deterministic synthetic parameters (shapes match nn.Conv2d(C, E, p, stride=p)).
    weight = jax.random.normal(kw, (embed_dim, C, patch_size, patch_size), dtype=jnp.float32) * 0.05
    bias = jax.random.normal(kb, (embed_dim,), dtype=jnp.float32) * 0.05

    out = patch_embed(x, weight, bias, patch_size)
    out = jax.block_until_ready(out)

    # Reference: XLA conv (NCHW) + flatten(2) + transpose(1,2), same as PyTorch forward.
    ref = lax.conv_general_dilated(
        x, weight,
        window_strides=(patch_size, patch_size),
        padding="VALID",
        dimension_numbers=("NCHW", "OIHW", "NCHW"),
    ) + bias.reshape(1, embed_dim, 1, 1)
    ref = ref.reshape(B, embed_dim, -1).transpose(0, 2, 1)

    assert out.shape == (B, (H // patch_size) * (W // patch_size), embed_dim)
    # bf16 inputs/output with f32 accumulation: loosened tolerance vs the f32 reference.
    assert jnp.allclose(out.astype(jnp.float32), ref, atol=2e-2, rtol=2e-2)
    print("KERNEL_OK")
</pallas_src>

<mosaic_0001>
module attributes {stable_mosaic.version = 11 : i64} {
  func.func @patch_embed_kernel(%arg0: i32, %arg1: memref<64x12xbf16, #tpu.memory_space<vmem>>, %arg2: memref<12x128xbf16, #tpu.memory_space<vmem>>, %arg3: memref<1x128xf32, #tpu.memory_space<vmem>>, %arg4: memref<64x32xbf16, #tpu.memory_space<vmem>>) attributes {dimension_semantics = [#tpu.dimension_semantics<parallel>], iteration_bounds = array<i64: 2>, scalar_prefetch = 0 : i64, scratch_operands = 0 : i64, tpu.core_type = #tpu.core_type<tc>, window_params = [{transform_indices = @transform_0, window_bounds = array<i64: 64, 12>}, {pipeline_mode = #tpu.pipeline_mode<synchronous>, transform_indices = @transform_1, window_bounds = array<i64: 12, 128>}, {pipeline_mode = #tpu.pipeline_mode<synchronous>, transform_indices = @transform_2, window_bounds = array<i64: 1, 128>}, {transform_indices = @transform_3, window_bounds = array<i64: 64, 32>}]} {
    %c0 = arith.constant 0 : index
    %c0_0 = arith.constant 0 : index
    %0 = vector.load %arg1[%c0, %c0_0] : memref<64x12xbf16, #tpu.memory_space<vmem>>, vector<64x12xbf16>
    %c0_1 = arith.constant 0 : index
    %c0_2 = arith.constant 0 : index
    %1 = vector.load %arg2[%c0_1, %c0_2] : memref<12x128xbf16, #tpu.memory_space<vmem>>, vector<12x128xbf16>
    %cst = arith.constant dense<0.000000e+00> : vector<64x128xf32>
    %2 = tpu.matmul %0, %1, %cst {dimension_numbers = #tpu.dot_dimension_numbers<[1], [0], [0], [1], [0, 0, 1, 1], [], []>} : vector<64x12xbf16>, vector<12x128xbf16>, vector<64x128xf32> -> vector<64x128xf32>
    %c0_3 = arith.constant 0 : index
    %c0_4 = arith.constant 0 : index
    %3 = vector.load %arg3[%c0_3, %c0_4] : memref<1x128xf32, #tpu.memory_space<vmem>>, vector<1x128xf32>
    %4 = vector.broadcast %3 : vector<1x128xf32> to vector<64x128xf32>
    %5 = arith.addf %2, %4 : vector<64x128xf32>
    %6 = vector.extract_strided_slice %5 {offsets = [0, 0], sizes = [64, 32], strides = [1, 1]} : vector<64x128xf32> to vector<64x32xf32>
    %7 = arith.truncf %6 : vector<64x32xf32> to vector<64x32xbf16>
    %c0_5 = arith.constant 0 : index
    %c0_6 = arith.constant 0 : index
    %8 = vector.load %arg4[%c0_5, %c0_6] : memref<64x32xbf16, #tpu.memory_space<vmem>>, vector<64x32xbf16>
    tpu.vector_store %arg4[%c0_5, %c0_6], %7 {strides = array<i32>} : memref<64x32xbf16, #tpu.memory_space<vmem>>, vector<64x32xbf16>,
    return
  }
  func.func @transform_0(%arg0: i32) -> (i32, i32) {
    %c0_i32 = arith.constant 0 : i32
    %c0_i32_0 = arith.constant 0 : i32
    return %arg0, %c0_i32 : i32, i32
  }
  func.func @transform_1(%arg0: i32) -> (i32, i32) {
    %c0_i32 = arith.constant 0 : i32
    %c0_i32_0 = arith.constant 0 : i32
    %c0_i32_1 = arith.constant 0 : i32
    return %c0_i32, %c0_i32_0 : i32, i32
  }
  func.func @transform_2(%arg0: i32) -> (i32, i32) {
    %c0_i32 = arith.constant 0 : i32
    %c0_i32_0 = arith.constant 0 : i32
    %c0_i32_1 = arith.constant 0 : i32
    return %c0_i32, %c0_i32_0 : i32, i32
  }
  func.func @transform_3(%arg0: i32) -> (i32, i32) {
    %c0_i32 = arith.constant 0 : i32
    %c0_i32_0 = arith.constant 0 : i32
    return %arg0, %c0_i32 : i32, i32
  }
}

</mosaic_0001>

<llo_original>
// kernel: tpu_custom_call.1
$region0: #{tpu_custom_call.1}
  #allocation0 [shape = 'u32[]', space=smem, size = 0x4, offset = 0x4, fixed_abs, tag = 'smem constant byte address 0x4 - core index']
  #allocation1 [shape = 'u32[144,128]{1,0:T(1,128)}', space=vmem, size = 0x12000, scoped, tag = 'internal scratch']
  %s0 = inlined_call_operand.vmem [shape: bf16[128,12], index: 0, kind: input, shape index: {}]
  %s1 = inlined_call_operand.vmem [shape: bf16[12,128], index: 1, kind: input, shape index: {}]
  %s2 = inlined_call_operand.vmem [shape: f32[1,128], index: 2, kind: input, shape index: {}]
  %s3 = inlined_call_operand.vmem [shape: bf16[128,32], index: 3, kind: output, shape index: {}]
  %s4 = sld [smem:[#allocation0]]
  $region45: #{tpu_custom_call.1} parent=0
    _
  %s6 = ssub.s32 1, %s4
  %s7 = scalar_select 0, %s6, %s4
  loop: start=0, step=1, limit=4
  $region2: #{tpu_custom_call.1} parent=0 // loop_pre_header
    _
  $region3: #{tpu_custom_call.1} parent=0 // loop_header
    %s9 = sphi 0, %s13
    %p10 = scmp.ge.s32.totalorder %s9, 4
    %s19 = sphi 0, %s21
    %s22 = sphi 0, %s19
    %s23 = sphi 0, %s22
    %s39 = sphi 0, %s23
    %s43 = sphi 0, %s43
    %s45 = sphi 0, %s43
    %s46 = sphi 0, %s45
    %s60 = sphi 0, %s46
    %s64 = sphi 0, %s64
    %s66 = sphi 0, %s64
    %s67 = sphi 0, %s66
    %s81 = sphi 0, %s67
    %s87 = sphi 0, %s89
    %s90 = sphi 0, %s87
    %s91 = sphi 0, %s90
    %s107 = sphi 0, %s91
  $region4: #{tpu_custom_call.1} parent=0 // loop_header_branch
    %12 = sbr.rel (%p10) target = $region8
  $region5: #{tpu_custom_call.1} parent=0 // loop_body
    %s14 = ssub.s32 %s9, 1
    %s15 = ssub.s32 %s9, 2
    %s16 = sadd.s32 %s9, 1
    %s17 = ssub.s32 %s9, %s16
    %p18 = scmp.eq.s32.totalorder %s17, 0
    %s20 = sadd.s32 %s19, 1
    %s21 = scalar_select %p18, %s19, %s20
    %p24 = pneg %p18
    %p25 = scmp.eq.s32.totalorder %s9, 1
    %p26 = por %p24, %p25
    %p27 = scmp.ne.s32.totalorder %s19, %s22
    %p28 = scmp.eq.s32.totalorder %s9, 0
    %p29 = por %p27, %p28
    %p30 = scmp.ne.s32.totalorder %s19, %s22
    %p31 = scmp.eq.s32.totalorder %s14, 1
    %p32 = por %p30, %p31
    %p33 = scmp.ne.s32.totalorder %s22, %s23
    %p34 = scmp.eq.s32.totalorder %s14, 0
    %p35 = por %p33, %p34
    %p36 = scmp.ne.s32.totalorder %s22, %s23
    %p37 = scmp.eq.s32.totalorder %s15, 1
    %p38 = por %p36, %p37
    %p40 = scmp.ne.s32.totalorder %s23, %s39
    %p41 = scmp.eq.s32.totalorder %s15, 0
    %p42 = por %p40, %p41
    %s44 = sadd.s32 %s43, 1
    %p47 = scmp.eq.s32.totalorder %s9, 1
    %p48 = scmp.ne.s32.totalorder %s43, %s45
    %p49 = scmp.eq.s32.totalorder %s9, 0
    %p50 = por %p48, %p49
    %p51 = scmp.ne.s32.totalorder %s43, %s45
    %p52 = scmp.eq.s32.totalorder %s14, 1
    %p53 = por %p51, %p52
    %p54 = scmp.ne.s32.totalorder %s45, %s46
    %p55 = scmp.eq.s32.totalorder %s14, 0
    %p56 = por %p54, %p55
    %p57 = scmp.ne.s32.totalorder %s45, %s46
    %p58 = scmp.eq.s32.totalorder %s15, 1
    %p59 = por %p57, %p58
    %p61 = scmp.ne.s32.totalorder %s46, %s60
    %p62 = scmp.eq.s32.totalorder %s15, 0
    %p63 = por %p61, %p62
    %s65 = sadd.s32 %s64, 1
    %p68 = scmp.eq.s32.totalorder %s9, 1
    %p69 = scmp.ne.s32.totalorder %s64, %s66
    %p70 = scmp.eq.s32.totalorder %s9, 0
    %p71 = por %p69, %p70
    %p72 = scmp.ne.s32.totalorder %s64, %s66
    %p73 = scmp.eq.s32.totalorder %s14, 1
    %p74 = por %p72, %p73
    %p75 = scmp.ne.s32.totalorder %s66, %s67
    %p76 = scmp.eq.s32.totalorder %s14, 0
    %p77 = por %p75, %p76
    %p78 = scmp.ne.s32.totalorder %s66, %s67
    %p79 = scmp.eq.s32.totalorder %s15, 1
    %p80 = por %p78, %p79
    %p82 = scmp.ne.s32.totalorder %s67, %s81
    %p83 = scmp.eq.s32.totalorder %s15, 0
    %p84 = por %p82, %p83
    %s85 = ssub.s32 %s9, %s16
    %p86 = scmp.eq.s32.totalorder %s85, 0
    %s88 = sadd.s32 %s87, 1
    %s89 = scalar_select %p86, %s87, %s88
    %p92 = pneg %p86
    %p93 = scmp.eq.s32.totalorder %s9, 1
    %p94 = por %p92, %p93
    %p95 = scmp.ne.s32.totalorder %s87, %s90
    %p96 = scmp.eq.s32.totalorder %s9, 0
    %p97 = por %p95, %p96
    %p98 = scmp.ne.s32.totalorder %s87, %s90
    %p99 = scmp.eq.s32.totalorder %s14, 1
    %p100 = por %p98, %p99
    %p101 = scmp.ne.s32.totalorder %s90, %s91
    %p102 = scmp.eq.s32.totalorder %s14, 0
    %p103 = por %p101, %p102
    %p104 = scmp.ne.s32.totalorder %s90, %s91
    %p105 = scmp.eq.s32.totalorder %s15, 1
    %p106 = por %p104, %p105
    %p108 = scmp.ne.s32.totalorder %s91, %s107
    %p109 = scmp.eq.s32.totalorder %s15, 0
    %p110 = por %p108, %p109
    %p111 = scmp.le.s32.totalorder 1, %s9
    %p112 = scmp.lt.s32.totalorder %s9, 3
    %p113 = pnand %p111, %p112
    %p114 = pneg %p113
    // Predicated region
    $region9: #{tpu_custom_call.1} parent=5 // pred_check
      _
    $region10: #{tpu_custom_call.1} parent=5 // pred_check_branch
      %116 = sbr.rel (%p113) target = $region12
    $region11: #{tpu_custom_call.1} parent=5 // pred_region
      %s117 = ssub.s32 %s9, 1
      // Predicated region
      $region13: #{tpu_custom_call.1} parent=11 // pred_check
        %p118 = pneg %p56
      $region14: #{tpu_custom_call.1} parent=11 // pred_check_branch
        %120 = sbr.rel (%p118) target = $region16
      $region15: #{tpu_custom_call.1} parent=11 // pred_region
        _
      $region16: #{tpu_custom_call.1} parent=11 // pred_fallthru
        _
      // Predicated region
      $region17: #{tpu_custom_call.1} parent=11 // pred_check
        %p121 = pneg %p77
      $region18: #{tpu_custom_call.1} parent=11 // pred_check_branch
        %123 = sbr.rel (%p121) target = $region20
      $region19: #{tpu_custom_call.1} parent=11 // pred_region
        _
      $region20: #{tpu_custom_call.1} parent=11 // pred_fallthru
        _
    $region12: #{tpu_custom_call.1} parent=5 // pred_fallthru
      _
    %p124 = scmp.lt.s32.totalorder %s9, 2
    // Predicated region
    $region21: #{tpu_custom_call.1} parent=5 // pred_check
      %p125 = pneg %p124
    $region22: #{tpu_custom_call.1} parent=5 // pred_check_branch
      %127 = sbr.rel (%p125) target = $region24
    $region23: #{tpu_custom_call.1} parent=5 // pred_region
      // Predicated region
      $region25: #{tpu_custom_call.1} parent=23 // pred_check
        %p128 = pneg %p29
      $region26: #{tpu_custom_call.1} parent=23 // pred_check_branch
        %130 = sbr.rel (%p128) target = $region28
      $region27: #{tpu_custom_call.1} parent=23 // pred_region
        %s131 = smul.u32 8, %s9
        %p132 = scmp.lt.s32.totalorder %s131, 15
        %s133 = scalar_select %p132, %s131, 15
        %s134 = smul.addr %s133, 4
        %s135 = scalar_lea.vmem %s0, %s134
        %s136 = smul.u32 8, %s9
      $region28: #{tpu_custom_call.1} parent=23 // pred_fallthru
        _
    $region24: #{tpu_custom_call.1} parent=5 // pred_fallthru
      _
    %p137 = scmp.le.s32.totalorder 1, %s9
    %p138 = scmp.lt.s32.totalorder %s9, 3
    %p139 = pnand %p137, %p138
    %p140 = pneg %p139
    // Predicated region
    $region29: #{tpu_custom_call.1} parent=5 // pred_check
      _
    $region30: #{tpu_custom_call.1} parent=5 // pred_check_branch
      %142 = sbr.rel (%p139) target = $region32
    $region31: #{tpu_custom_call.1} parent=5 // pred_region
      %s143 = ssub.s32 %s9, 1
      %s144 = smul.u32 8, %s14
      %p145 = scmp.lt.s32.totalorder %s144, 15
      %s146 = scalar_select %p145, %s144, 15
      %s147 = smul.addr %s146, 4
      %s148 = scalar_lea.vmem %s0, %s147
      %p149 = pneg %p35
      %p150 = pneg %p32
      %p151 = pneg %p56
      %p152 = pneg %p53
      %p153 = pneg %p77
      %p154 = pneg %p74
      %p155 = pneg %p103
      %p156 = pneg %p100
      %s157 = smul.u32 8, %s14
      %p158 = scmp.lt.s32.totalorder %s157, 15
      %s159 = scalar_select %p158, %s157, 15
      %s160 = smul.addr %s159, 4
      %s161 = scalar_lea.vmem %s3, %s160
      %s162 = smul.u32 8, %s14
      %p163 = scmp.lt.s32.totalorder %s162, 15
      %s164 = scalar_select %p163, %s162, 15
      %s165 = smul.addr %s164, 4
      %s166 = scalar_lea.vmem %s0, %s165
      %s167 = smul.u32 8, %s14
      %s168 = smul.u32 8, %s14
      %p169 = scmp.lt.s32.totalorder %s168, 15
      %s170 = scalar_select %p169, %s168, 15
      %s171 = smul.addr %s170, 4
      %s172 = scalar_lea.vmem %s3, %s171
      %s173 = smul.u32 8, %s14
      %v175 = vld [vmem:[%s166] sm:$0xf]
      %v176 = vld [vmem:[%s166 + $0x4] sm:$0xf]
      %v177 = vld [vmem:[%s166 + $0x8] sm:$0xf]
      %v178 = vld [vmem:[%s166 + $0xc] sm:$0xf]
      %v179 = vld [vmem:[%s166 + $0x10] sm:$0xf]
      %v180 = vld [vmem:[%s166 + $0x14] sm:$0xf]
      %v181 = vld [vmem:[%s166 + $0x18] sm:$0xf]
      %v182 = vld [vmem:[%s166 + $0x1c] sm:$0xf]
      %v183 = vld [vmem:[%s1] sm:$0xf]
      %v184 = vld [vmem:[%s1 + $0x4] sm:$0x3]
      %v185 = vld [vmem:[%s2] sm:$0x1]
      %v187 = vlaneseq
      %v188 = vshrl.u32 %v187, 7
      %v189 = vsub.s32 0, %v188
      %v190 = vrot.slane %v185, %v189
      %v200 = vunpack.c.l.b16 %v175
      %v201 = vunpack.c.l.b16 %v176
      %v202 = vunpack.c.l.b16 %v177
      %v203 = vunpack.c.l.b16 %v178
      %v204 = vunpack.c.l.b16 %v179
      %v205 = vunpack.c.l.b16 %v180
      %v206 = vunpack.c.l.b16 %v181
      %v207 = vunpack.c.l.b16 %v182
      %v208 = vpack.c.b16 %v201, %v200
      %v209 = vpack.c.b16 %v203, %v202
      %v210 = vpack.c.b16 %v205, %v204
      %v211 = vpack.c.b16 %v207, %v206
      %v214 = vunpack.c.l.b16 %v183
      %v215 = vunpack.c.l.b16 %v184
      %v216 = vpack.c.b16 %v215, %v214
      %vm217 = vcmask 97280
      %v219 = vsel %vm217, %v208, 0
      %v222 = vsel %vm217, %v209, 0
      %v225 = vsel %vm217, %v210, 0
      %v228 = vsel %vm217, %v211, 0
      %vm230 = vcmask 1045504
      %v232 = vsel %vm230, %v216, 0
      %234 = vmatprep.subr.bf16.mxu0 0
      %235 = vmatpush1.bf16.msra.mxu0 %v232
      %236 = vmatprep.subr.bf16.mxu0 0
      %237 = vmatpush1.bf16.msra.mxu0 0
      %238 = vmatprep.subr.bf16.mxu0 0
      %239 = vmatpush1.bf16.msra.mxu0 0
      %240 = vmatprep.subr.bf16.mxu0 0
      %241 = vmatpush1.bf16.msra.mxu0 0
      %242 = vmatprep.subr.bf16.mxu0 0
      %243 = vmatpush1.bf16.msra.mxu0 0
      %244 = vmatprep.subr.bf16.mxu0 0
      %245 = vmatpush1.bf16.msra.mxu0 0
      %246 = vmatprep.subr.bf16.mxu0 0
      %247 = vmatpush1.bf16.msra.mxu0 0
      %248 = vmatprep.subr.bf16.mxu0 0
      %249 = vmatpush1.bf16.msra.mxu0 0
      %250 = vmatprep.subr.bf16.mxu0 0
      %251 = vmatpush1.bf16.msra.mxu0 0
      %252 = vmatprep.subr.bf16.mxu0 0
      %253 = vmatpush1.bf16.msra.mxu0 0
      %254 = vmatprep.subr.bf16.mxu0 0
      %255 = vmatpush1.bf16.msra.mxu0 0
      %256 = vmatprep.subr.bf16.mxu0 0
      %257 = vmatpush1.bf16.msra.mxu0 0
      %258 = vmatprep.subr.bf16.mxu0 0
      %259 = vmatpush1.bf16.msra.mxu0 0
      %260 = vmatprep.subr.bf16.mxu0 0
      %261 = vmatpush1.bf16.msra.mxu0 0
      %262 = vmatprep.subr.bf16.mxu0 0
      %263 = vmatpush1.bf16.msra.mxu0 0
      %264 = vmatprep.subr.bf16.mxu0 0
      %265 = vmatpush1.bf16.msra.mxu0 0
      %266 = vmatprep.mubr.bf16.mxu0 0
      %267 = vmatmul.mubr.bf16.gmra.mrb[0].mxu0 %v219
      %v268 = vpop.f32.mrb[0].mxu0
      %v269 = vadd.f32 %v190, %v268
      %v270 = vpop.f32.mrb[0].mxu0
      %v271 = vpop.f32.mrb[0].mxu0
      %v272 = vadd.f32 %v190, %v271
      %v273 = vpop.f32.mrb[0].mxu0
      %274 = vmatprep.mubr.bf16.mxu0 0
      %275 = vmatmul.mubr.bf16.gmra.mrb[0].mxu0 %v222
      %v276 = vpop.f32.mrb[0].mxu0
      %v277 = vadd.f32 %v190, %v276
      %v278 = vpop.f32.mrb[0].mxu0
      %v279 = vpop.f32.mrb[0].mxu0
      %v280 = vadd.f32 %v190, %v279
      %v281 = vpop.f32.mrb[0].mxu0
      %282 = vmatprep.mubr.bf16.mxu0 0
      %283 = vmatmul.mubr.bf16.gmra.mrb[0].mxu0 %v225
      %v284 = vpop.f32.mrb[0].mxu0
      %v285 = vadd.f32 %v190, %v284
      %v286 = vpop.f32.mrb[0].mxu0
      %v287 = vpop.f32.mrb[0].mxu0
      %v288 = vadd.f32 %v190, %v287
      %v289 = vpop.f32.mrb[0].mxu0
      %290 = vmatprep.mubr.bf16.mxu0 0
      %291 = vmatmul.mubr.bf16.gmra.mrb[0].mxu0 %v228
      %v292 = vpop.f32.mrb[0].mxu0
      %v293 = vadd.f32 %v190, %v292
      %v294 = vpop.f32.mrb[0].mxu0
      %v295 = vpop.f32.mrb[0].mxu0
      %v296 = vadd.f32 %v190, %v295
      %v297 = vpop.f32.mrb[0].mxu0
      %298 = vdwg.mxu0
      %v299 = vpack.c.bf16 %v272, %v269
      %v300 = vpack.c.bf16 %v280, %v277
      %v301 = vpack.c.bf16 %v288, %v285
      %v302 = vpack.c.bf16 %v296, %v293
      %v307 = vunpack.c.l.b16 %v299
      %v308 = vunpack.c.h.b16 %v299
      %v309 = vunpack.c.l.b16 %v300
      %v310 = vunpack.c.h.b16 %v300
      %v311 = vunpack.c.l.b16 %v301
      %v312 = vunpack.c.h.b16 %v301
      %v313 = vunpack.c.l.b16 %v302
      %v314 = vunpack.c.h.b16 %v302
      %v315 = vpack.c.b16 %v307, %v307
      %v316 = vpack.c.b16 %v308, %v308
      %v317 = vpack.c.b16 %v309, %v309
      %v318 = vpack.c.b16 %v310, %v310
      %v319 = vpack.c.b16 %v311, %v311
      %v320 = vpack.c.b16 %v312, %v312
      %v321 = vpack.c.b16 %v313, %v313
      %v322 = vpack.c.b16 %v314, %v314
      %vm331 = vcmask 257024
      %332 = vst.msk [vmem:[%s172] sm:$0xf] %vm331, %v315
      %333 = vst.msk [vmem:[%s172 + $0x4] sm:$0xf] %vm331, %v316
      %334 = vst.msk [vmem:[%s172 + $0x8] sm:$0xf] %vm331, %v317
      %335 = vst.msk [vmem:[%s172 + $0xc] sm:$0xf] %vm331, %v318
      %336 = vst.msk [vmem:[%s172 + $0x10] sm:$0xf] %vm331, %v319
      %337 = vst.msk [vmem:[%s172 + $0x14] sm:$0xf] %vm331, %v320
      %338 = vst.msk [vmem:[%s172 + $0x18] sm:$0xf] %vm331, %v321
      %339 = vst.msk [vmem:[%s172 + $0x1c] sm:$0xf] %vm331, %v322
      %s340 = smul.u32 8, %s14
      %p341 = scmp.lt.s32.totalorder %s340, 15
      %s342 = scalar_select %p341, %s340, 15
      %s343 = smul.addr %s342, 4
      %s344 = scalar_lea.vmem %s3, %s343
      // Predicated region
      $region33: #{tpu_custom_call.1} parent=31 // pred_check
        %p345 = pneg %p100
      $region34: #{tpu_custom_call.1} parent=31 // pred_check_branch
        %347 = sbr.rel (%p345) target = $region36
      $region35: #{tpu_custom_call.1} parent=31 // pred_region
        %s348 = smul.u32 8, %s14
      $region36: #{tpu_custom_call.1} parent=31 // pred_fallthru
        _
    $region32: #{tpu_custom_call.1} parent=5 // pred_fallthru
      _
    %p349 = scmp.le.s32.totalorder 2, %s9
    // Predicated region
    $region37: #{tpu_custom_call.1} parent=5 // pred_check
      %p350 = pneg %p349
    $region38: #{tpu_custom_call.1} parent=5 // pred_check_branch
      %352 = sbr.rel (%p350) target = $region40
    $region39: #{tpu_custom_call.1} parent=5 // pred_region
      %s353 = ssub.s32 %s9, 2
      // Predicated region
      $region41: #{tpu_custom_call.1} parent=39 // pred_check
        %p354 = pneg %p106
      $region42: #{tpu_custom_call.1} parent=39 // pred_check_branch
        %356 = sbr.rel (%p354) target = $region44
      $region43: #{tpu_custom_call.1} parent=39 // pred_region
        %s357 = smul.u32 8, %s15
        %p358 = scmp.lt.s32.totalorder %s357, 15
        %s359 = scalar_select %p358, %s357, 15
        %s360 = smul.addr %s359, 4
        %s361 = scalar_lea.vmem %s3, %s360
      $region44: #{tpu_custom_call.1} parent=39 // pred_fallthru
        _
    $region40: #{tpu_custom_call.1} parent=5 // pred_fallthru
      _
  $region6: #{tpu_custom_call.1} parent=0 // loop_footer
    %s13 = sadd.s32 1, %s9
  $region7: #{tpu_custom_call.1} parent=0 // loop_footer_branch
    %8 = sbr.rel target = $region3
  $region8: #{tpu_custom_call.1} parent=0 // loop_exit
    _

</llo_original>
